<compile_context>
chip_gen: v7x
topology: tpu7x:2x2x1
jax: 0.10.0
libtpu: 0.0.40
codegen_flags: <defaults>
</compile_context>

<pallas_src>
import jax
import jax.numpy as jnp
from jax.experimental import pallas as pl
from jax.experimental.pallas import tpu as pltpu

_LANE = 128
# Preferred lane-dense widths for the flattened (rows, W) view.
_FLAT_WIDTHS = (1024, 512, 256, 128)


def _relu_kernel(x_ref, o_ref):
    # Weak-typed scalar 0: no zeros tile broadcast into vregs; one vmax per vld.
    o_ref[...] = jnp.maximum(x_ref[...], 0)


def _sublane_multiple(dtype):
    # Sub-32-bit dtypes pack along sublanes: f32 -> 8, bf16 -> 16, int8/fp8 -> 32.
    return 8 * max(1, 4 // jnp.dtype(dtype).itemsize)


def _chip_budgets():
    """(block_bytes, single_block_bytes, vmem_limit_bytes or None) per generation."""
    kind = ""
    try:
        kind = jax.devices()[0].device_kind.lower()
    except Exception:
        pass
    if "v7" in kind or "7x" in kind or "v6" in kind:
        # 32 MiB scoped-VMEM default on v6e/v7x: 4 MiB blocks (4 double-buffered
        # copies = 16 MiB) and a 12 MiB single-block fast path (in+out = 24 MiB).
        return 4 << 20, 12 << 20, 32 << 20
    # v5e (16 MiB scoped default) and unknown chips: conservative sizing, default
    # limit. 2 MiB blocks -> 8 MiB of buffers; 4 MiB single block -> 8 MiB resident.
    return 2 << 20, 4 << 20, None


def _pick_2d_view(x):
    """Free (bitcast) 2D view of x; prefers a lane-dense flattened (rows, W) slab."""
    n = x.size
    for w in _FLAT_WIDTHS:
        if n >= w and n % w == 0:
            return x.reshape(n // w, w)
    if x.ndim == 0:
        return x.reshape(1, 1)
    d = int(x.shape[-1])
    # Ragged fallback: natural view. Non-128-multiple last dim only costs masked
    # stores inside VMEM, not any extra HBM traffic.
    return x.reshape(n // d, d)


def _relu_2d(x2, block_bytes, single_block_bytes, vmem_limit_bytes):
    rows, cols = x2.shape
    itemsize = x2.dtype.itemsize
    total_bytes = rows * cols * itemsize

    if total_bytes <= single_block_bytes:
        # Single VMEM-resident block: no grid, no pipeline / per-step DMA overhead.
        return pl.pallas_call(
            _relu_kernel,
            out_shape=jax.ShapeDtypeStruct((rows, cols), x2.dtype),
        )(x2)

    sub = _sublane_multiple(x2.dtype)

    # Column tile: full extent when `sub` rows of it fit in one block; otherwise a
    # 128-multiple tile (only for very wide last dims), partial last column block.
    max_cols = max(_LANE, block_bytes // (sub * itemsize))
    cols_pb = cols if cols <= max_cols else (max_cols // _LANE) * _LANE

    rows_pb = block_bytes // (cols_pb * itemsize)
    rows_pb = max(sub, (rows_pb // sub) * sub)
    rows_pb = min(rows_pb, rows)  # either == rows (full extent) or a multiple of sub

    if cols_pb == cols:
        grid = (pl.cdiv(rows, rows_pb),)
        in_spec = pl.BlockSpec((rows_pb, cols), lambda i: (i, 0))
        out_spec = pl.BlockSpec((rows_pb, cols), lambda i: (i, 0))
    else:
        grid = (pl.cdiv(rows, rows_pb), pl.cdiv(cols, cols_pb))
        in_spec = pl.BlockSpec((rows_pb, cols_pb), lambda i, j: (i, j))
        out_spec = pl.BlockSpec((rows_pb, cols_pb), lambda i, j: (i, j))

    # TODO(synk): on v7x, pltpu.CORE_PARALLEL with an explicit leading core axis
    # would guarantee 2-TensorCore sharding; "parallel" is the portable choice.
    cp_kwargs = {"dimension_semantics": ("parallel",) * len(grid)}
    if vmem_limit_bytes is not None:
        cp_kwargs["vmem_limit_bytes"] = vmem_limit_bytes

    return pl.pallas_call(
        _relu_kernel,
        out_shape=jax.ShapeDtypeStruct((rows, cols), x2.dtype),
        grid_spec=pltpu.PrefetchScalarGridSpec(
            num_scalar_prefetch=0,
            grid=grid,
            in_specs=[in_spec],
            out_specs=out_spec,
        ),
        compiler_params=pltpu.CompilerParams(**cp_kwargs),
    )(x2)


def functional_module_relu(x):
    """Pallas implementation of FunctionalModule(torch.nn.functional.relu)."""
    if x.size == 0:
        return x
    block_bytes, single_block_bytes, vmem_limit_bytes = _chip_budgets()
    x2 = _pick_2d_view(x)  # free reshape of a contiguous array (bitcast)
    y2 = _relu_2d(x2, block_bytes, single_block_bytes, vmem_limit_bytes)
    return y2.reshape(x.shape)  # free reshape back, no padding was introduced


def functional_module_transpose01(x):
    """FunctionalModule(lambda x: x.transpose(0, 1)) — layout-only, plain JAX glue."""
    # TODO(synk): pure data-movement functional; no compute hot path to put in a kernel.
    return jnp.swapaxes(x, 0, 1)


if __name__ == "__main__":
    key = jax.random.PRNGKey(0)
    k1, k2, k3, k4 = jax.random.split(key, 4)

    # Small Emformer-like activation (B=2, T=8, D=128): single-block path, flat view.
    x_small = jax.random.normal(k1, (2, 8, 128), dtype=jnp.float32)
    y_small = jax.block_until_ready(functional_module_relu(x_small))
    assert y_small.shape == x_small.shape and y_small.dtype == x_small.dtype
    assert bool(jnp.allclose(y_small, jnp.maximum(x_small, 0.0))), "relu mismatch (small)"

    # bf16 activation (packed dtype): exercises the 16-row sublane granule logic.
    x_bf16 = jax.random.normal(k2, (2, 64, 384), dtype=jnp.bfloat16)
    y_bf16 = jax.block_until_ready(functional_module_relu(x_bf16))
    assert y_bf16.dtype == jnp.bfloat16
    assert bool(jnp.all(y_bf16 == jnp.maximum(x_bf16, 0))), "relu mismatch (bf16)"

    # Ragged shape (rows not a multiple of 8, D=96 not a multiple of 128):
    # natural view, no pad / un-pad round trips.
    x_ragged = jax.random.normal(k3, (3, 5, 96), dtype=jnp.float32)
    y_ragged = jax.block_until_ready(functional_module_relu(x_ragged))
    assert bool(jnp.allclose(y_ragged, jnp.maximum(x_ragged, 0.0))), "relu mismatch (ragged)"

    # 16 MiB activation: exercises the row-tiled pipelined path on every generation
    # via the flat lane-dense (4096, 1024) view.
    x_big = jax.random.normal(k4, (4, 1024, 1024), dtype=jnp.float32)
    y_big = jax.block_until_ready(functional_module_relu(x_big))
    assert bool(jnp.allclose(y_big, jnp.maximum(x_big, 0.0))), "relu mismatch (big)"

    # Large ragged 2-D activation: natural (4099, 772) view, partial last row block
    # (clipped write-back DMA), still zero padding traffic.
    x_big_ragged = jax.random.normal(k1, (4099, 772), dtype=jnp.float32)
    y_big_ragged = jax.block_until_ready(functional_module_relu(x_big_ragged))
    assert bool(jnp.allclose(y_big_ragged, jnp.maximum(x_big_ragged, 0.0))), \
        "relu mismatch (big ragged)"

    # Layout-only functional variant (plain JAX glue).
    z = jax.block_until_ready(functional_module_transpose01(x_small))
    assert z.shape == (8, 2, 128)

    print("KERNEL_OK")
</pallas_src>

<mosaic_0001>
module attributes {stable_mosaic.version = 11 : i64} {
  func.func @_relu_kernel(%arg0: memref<2x1024xf32, #tpu.memory_space<vmem>>, %arg1: memref<2x1024xf32, #tpu.memory_space<vmem>>) attributes {dimension_semantics = [], scalar_prefetch = 0 : i64, scratch_operands = 0 : i64, tpu.core_type = #tpu.core_type<tc>} {
    %c0 = arith.constant 0 : index
    %c0_0 = arith.constant 0 : index
    %0 = vector.load %arg0[%c0, %c0_0] : memref<2x1024xf32, #tpu.memory_space<vmem>>, vector<2x1024xf32>
    %cst = arith.constant 0.000000e+00 : f32
    %1 = vector.broadcast %cst : f32 to vector<2x1024xf32>
    %2 = arith.maximumf %0, %1 : vector<2x1024xf32>
    %c0_1 = arith.constant 0 : index
    %c0_2 = arith.constant 0 : index
    %3 = vector.load %arg1[%c0_1, %c0_2] : memref<2x1024xf32, #tpu.memory_space<vmem>>, vector<2x1024xf32>
    tpu.vector_store %arg1[%c0_1, %c0_2], %2 {strides = array<i32>} : memref<2x1024xf32, #tpu.memory_space<vmem>>, vector<2x1024xf32>,
    return
  }
}

</mosaic_0001>

<llo_original>
// kernel: tpu_custom_call.1
$region0: #{tpu_custom_call.1}
  #allocation0 [shape = 'u32[]', space=smem, size = 0x4, offset = 0x4, fixed_abs, tag = 'smem constant byte address 0x4 - core index']
  #allocation1 [shape = 'u32[144,128]{1,0:T(1,128)}', space=vmem, size = 0x12000, scoped, tag = 'internal scratch']
  %s0 = inlined_call_operand.hbm [shape: f32[2,1024], index: 0, kind: input, shape index: {}]
  %s1 = inlined_call_operand.hbm [shape: f32[2,1024], index: 1, kind: output, shape index: {}]
  %s2 = sld [smem:[#allocation0]]
  $region18: #{tpu_custom_call.1} parent=0
    _
  %s4 = ssub.s32 1, %s2
  %s5 = scalar_select 0, %s4, %s2
  $region1: #{tpu_custom_call.1} parent=0
    #allocation2 [shape = 'u8[8192]{0}', space=vmem, size = 0x2000, scoped, tag = 'input window, operand 0, single buffered']
    #allocation3 [shape = 's32[1]{0}', space=sflag, size = 0x4, scoped, tag = 'scoped memory for tpu_custom_call.1']
    #allocation4 [shape = 's32[1]{0}', space=sflag, size = 0x4, scoped, tag = 'scoped memory for tpu_custom_call.1']
    #allocation5 [shape = 'u8[8192]{0}', space=vmem, size = 0x2000, scoped, tag = 'output window, operand 0, single buffered']
    %6 = vsyncpa [#allocation3], 0
    %7 = vsyncpa [#allocation4], 0
    // Predicated region
    $region2: #{tpu_custom_call.1} parent=1 // pred_check
      _
    $region3: #{tpu_custom_call.1} parent=1 // pred_check_branch
      %9 = sbr.rel (0) target = $region5
    $region4: #{tpu_custom_call.1} parent=1 // pred_region
      %s11 = ssub.s32 256, 256
      %12 = vsyncadd [#allocation3], %s11
      %s14 = sshll.u32 [#allocation2], 4
      %s15 = int_to_ptr.vmem [resolvable:$true] %s14
      %17 = dma.hbm_to_vmem [thread:$0]  %s0, 256, %s15, [#allocation3]
    $region5: #{tpu_custom_call.1} parent=1 // pred_fallthru
      _
    // Predicated region
    $region6: #{tpu_custom_call.1} parent=1 // pred_check
      _
    $region7: #{tpu_custom_call.1} parent=1 // pred_check_branch
      %19 = sbr.rel (0) target = $region9
    $region8: #{tpu_custom_call.1} parent=1 // pred_region
      %20 = dma.done [#allocation3], 256
    $region9: #{tpu_custom_call.1} parent=1 // pred_fallthru
      _
    %v21 = vld [vmem:[#allocation2] sm:$0xff]
    %v22 = vld [vmem:[#allocation2 + $0x8] sm:$0xff]
    %v23 = vmax.f32 %v21, 0.0
    %v24 = vmax.f32 %v22, 0.0
    %25 = vst [vmem:[#allocation5] sm:$0xff] %v23
    %26 = vst [vmem:[#allocation5 + $0x8] sm:$0xff] %v24
    // Predicated region
    $region10: #{tpu_custom_call.1} parent=1 // pred_check
      _
    $region11: #{tpu_custom_call.1} parent=1 // pred_check_branch
      %28 = sbr.rel (0) target = $region13
    $region12: #{tpu_custom_call.1} parent=1 // pred_region
      %s30 = ssub.s32 256, 256
      %31 = vsyncadd [#allocation4], %s30
      %s33 = sshll.u32 [#allocation5], 4
      %s34 = int_to_ptr.vmem [resolvable:$true] %s33
      %36 = dma.vmem_to_hbm [thread:$0]  %s34, 256, %s1, [#allocation4]
    $region13: #{tpu_custom_call.1} parent=1 // pred_fallthru
      _
    // Predicated region
    $region14: #{tpu_custom_call.1} parent=1 // pred_check
      _
    $region15: #{tpu_custom_call.1} parent=1 // pred_check_branch
      %38 = sbr.rel (0) target = $region17
    $region16: #{tpu_custom_call.1} parent=1 // pred_region
      %39 = dma.done [#allocation4], 256
    $region17: #{tpu_custom_call.1} parent=1 // pred_fallthru
      _
    %40 = vsyncpa [#allocation3], 1
    %41 = vsyncpa [#allocation4], 1

</llo_original>
